<compile_context>
chip_gen: v5e
topology: v5e:2x2
jax: 0.10.0
libtpu: 0.0.40
codegen_flags: <defaults>
</compile_context>

<pallas_src>
import jax
import jax.numpy as jnp
from jax.experimental import pallas as pl
from jax.experimental.pallas import tpu as pltpu


def _round_up(x: int, m: int) -> int:
    return ((x + m - 1) // m) * m


def _mlp_kernel(x_ref, w1_ref, b1_ref, w2_ref, b2_ref, o_ref):
    # First linear: bf16 operands on the MXU, f32 accumulation.
    h = jnp.dot(x_ref[...], w1_ref[...], preferred_element_type=jnp.float32)
    h = jnp.maximum(h + b1_ref[...], 0.0)          # bias + ReLU in f32
    # Second linear: downcast activations to bf16 for the MXU, accumulate f32.
    o = jnp.dot(h.astype(jnp.bfloat16), w2_ref[...],
                preferred_element_type=jnp.float32)
    o = jnp.maximum(o + b2_ref[...], 0.0)          # bias + ReLU in f32
    o_ref[...] = o.astype(o_ref.dtype)             # lane-dense (TB, 128k) store


def fashion_mnist_model_v1(x_nchw, w1, b1, w2, b2, *, batch_tile: int = 128):
    """Forward pass.

    x_nchw: [B, C, H, W] float32
    w1: [D, Hn] (in_features x hidden), b1: [Hn]
    w2: [Hn, O], b2: [O]
    Returns [B, O] float32 (same math as the PyTorch module).
    """
    B = x_nchw.shape[0]
    D, Hn = w1.shape
    O = w2.shape[1]

    # nn.Flatten(): row-major flatten of all non-batch dims.
    x = x_nchw.reshape(B, -1).astype(jnp.float32)
    assert x.shape[1] == D, (x.shape, D)

    # ---- Pad everything to TPU-friendly sizes (128 lanes, 8 sublanes). ----
    Dp = _round_up(D, 128)                      # contraction dim of matmul 1
    Hp = _round_up(Hn, 128)                     # hidden: N of matmul 1, K of matmul 2
    Op = _round_up(O, 128)                      # lane-dense output
    TB = min(batch_tile, _round_up(B, 8))       # batch tile (sublane-aligned)
    # Keep the per-step x tile modest so double-buffered input + resident
    # weights fit comfortably in v7x's smaller VMEM.
    TB = min(TB, 512)
    Bp = _round_up(B, TB)

    x_p = jnp.zeros((Bp, Dp), jnp.float32).at[:B, :D].set(x).astype(jnp.bfloat16)
    w1_p = jnp.zeros((Dp, Hp), jnp.float32).at[:D, :Hn].set(w1).astype(jnp.bfloat16)
    w2_p = jnp.zeros((Hp, Op), jnp.float32).at[:Hn, :O].set(w2).astype(jnp.bfloat16)
    b1_p = jnp.zeros((1, Hp), jnp.float32).at[0, :Hn].set(b1)
    b2_p = jnp.zeros((1, Op), jnp.float32).at[0, :O].set(b2)

    grid = (Bp // TB,)

    flops = 2 * Bp * (Dp * Hp + Hp * Op)
    bytes_accessed = (x_p.size * 2 + w1_p.size * 2 + w2_p.size * 2
                      + b1_p.size * 4 + b2_p.size * 4 + Bp * Op * 4)

    out_padded = pl.pallas_call(
        _mlp_kernel,
        out_shape=jax.ShapeDtypeStruct((Bp, Op), jnp.float32),
        grid=grid,
        in_specs=[
            pl.BlockSpec((TB, Dp), lambda i: (i, 0)),   # x: streamed per batch tile
            pl.BlockSpec((Dp, Hp), lambda i: (0, 0)),   # w1: VMEM-resident
            pl.BlockSpec((1, Hp), lambda i: (0, 0)),    # b1: VMEM-resident
            pl.BlockSpec((Hp, Op), lambda i: (0, 0)),   # w2: VMEM-resident
            pl.BlockSpec((1, Op), lambda i: (0, 0)),    # b2: VMEM-resident
        ],
        out_specs=pl.BlockSpec((TB, Op), lambda i: (i, 0)),
        compiler_params=pltpu.CompilerParams(
            dimension_semantics=("parallel",)),         # batch axis -> both TCs on v7x
        cost_estimate=pl.CostEstimate(
            flops=flops, transcendentals=0, bytes_accessed=bytes_accessed),
    )(x_p, w1_p, b1_p, w2_p, b2_p)

    # Strip the batch / output padding.
    return out_padded[:B, :O]


def init_params(key, input_size, hidden_neurons, output_size):
    """Deterministic init mimicking nn.Linear default (uniform +/- 1/sqrt(fan_in))."""
    k1, k2, k3, k4 = jax.random.split(key, 4)
    bound1 = 1.0 / jnp.sqrt(input_size)
    bound2 = 1.0 / jnp.sqrt(hidden_neurons)
    # Stored as [in_features, out_features] so the kernel computes x @ W + b.
    w1 = jax.random.uniform(k1, (input_size, hidden_neurons),
                            minval=-bound1, maxval=bound1, dtype=jnp.float32)
    b1 = jax.random.uniform(k2, (hidden_neurons,),
                            minval=-bound1, maxval=bound1, dtype=jnp.float32)
    w2 = jax.random.uniform(k3, (hidden_neurons, output_size),
                            minval=-bound2, maxval=bound2, dtype=jnp.float32)
    b2 = jax.random.uniform(k4, (output_size,),
                            minval=-bound2, maxval=bound2, dtype=jnp.float32)
    return w1, b1, w2, b2


if __name__ == "__main__":
    # Small shapes consistent with the module: B=2, C=1, 16x16 image
    # -> input_size = 256, hidden_neurons = 32, output_size = 10.
    B, C, Himg, Wimg = 2, 1, 16, 16
    input_size = C * Himg * Wimg
    hidden_neurons = 32
    output_size = 10

    key = jax.random.PRNGKey(0)
    kx, kp = jax.random.split(key)
    x = jax.random.normal(kx, (B, C, Himg, Wimg), dtype=jnp.float32)
    w1, b1, w2, b2 = init_params(kp, input_size, hidden_neurons, output_size)

    out = fashion_mnist_model_v1(x, w1, b1, w2, b2)
    out = jax.block_until_ready(out)

    # Reference in plain JAX (f32, same math as the PyTorch forward).
    xf = x.reshape(B, -1)
    ref = jnp.maximum(jnp.maximum(xf @ w1 + b1, 0.0) @ w2 + b2, 0.0)
    assert out.shape == (B, output_size), out.shape
    # bf16 matmul operands with f32 accumulation -> relaxed tolerance.
    assert jnp.allclose(out, ref, atol=2e-2, rtol=2e-2), (
        float(jnp.max(jnp.abs(out - ref))))

    print("KERNEL_OK")
</pallas_src>

<mosaic_0001>
module attributes {stable_mosaic.version = 11 : i64} {
  func.func @_mlp_kernel(%arg0: i32, %arg1: memref<8x256xbf16, #tpu.memory_space<vmem>>, %arg2: memref<256x128xbf16, #tpu.memory_space<vmem>>, %arg3: memref<1x128xf32, #tpu.memory_space<vmem>>, %arg4: memref<128x128xbf16, #tpu.memory_space<vmem>>, %arg5: memref<1x128xf32, #tpu.memory_space<vmem>>, %arg6: memref<8x128xf32, #tpu.memory_space<vmem>>) attributes {dimension_semantics = [#tpu.dimension_semantics<parallel>], iteration_bounds = array<i64: 1>, scalar_prefetch = 0 : i64, scratch_operands = 0 : i64, tpu.core_type = #tpu.core_type<tc>, window_params = [{transform_indices = @transform_0, window_bounds = array<i64: 8, 256>}, {pipeline_mode = #tpu.pipeline_mode<synchronous>, transform_indices = @transform_1, window_bounds = array<i64: 256, 128>}, {pipeline_mode = #tpu.pipeline_mode<synchronous>, transform_indices = @transform_2, window_bounds = array<i64: 1, 128>}, {pipeline_mode = #tpu.pipeline_mode<synchronous>, transform_indices = @transform_3, window_bounds = array<i64: 128, 128>}, {pipeline_mode = #tpu.pipeline_mode<synchronous>, transform_indices = @transform_4, window_bounds = array<i64: 1, 128>}, {transform_indices = @transform_5, window_bounds = array<i64: 8, 128>}]} {
    %c0 = arith.constant 0 : index
    %c0_0 = arith.constant 0 : index
    %0 = vector.load %arg1[%c0, %c0_0] : memref<8x256xbf16, #tpu.memory_space<vmem>>, vector<8x256xbf16>
    %c0_1 = arith.constant 0 : index
    %c0_2 = arith.constant 0 : index
    %1 = vector.load %arg2[%c0_1, %c0_2] : memref<256x128xbf16, #tpu.memory_space<vmem>>, vector<256x128xbf16>
    %cst = arith.constant dense<0.000000e+00> : vector<8x128xf32>
    %2 = tpu.matmul %0, %1, %cst {dimension_numbers = #tpu.dot_dimension_numbers<[1], [0], [0], [1], [0, 0, 1, 1], [], []>} : vector<8x256xbf16>, vector<256x128xbf16>, vector<8x128xf32> -> vector<8x128xf32>
    %c0_3 = arith.constant 0 : index
    %c0_4 = arith.constant 0 : index
    %3 = vector.load %arg3[%c0_3, %c0_4] : memref<1x128xf32, #tpu.memory_space<vmem>>, vector<1x128xf32>
    %4 = vector.broadcast %3 : vector<1x128xf32> to vector<8x128xf32>
    %5 = arith.addf %2, %4 : vector<8x128xf32>
    %cst_5 = arith.constant 0.000000e+00 : f32
    %6 = vector.broadcast %cst_5 : f32 to vector<8x128xf32>
    %7 = arith.maximumf %5, %6 : vector<8x128xf32>
    %8 = arith.truncf %7 : vector<8x128xf32> to vector<8x128xbf16>
    %c0_6 = arith.constant 0 : index
    %c0_7 = arith.constant 0 : index
    %9 = vector.load %arg4[%c0_6, %c0_7] : memref<128x128xbf16, #tpu.memory_space<vmem>>, vector<128x128xbf16>
    %cst_8 = arith.constant dense<0.000000e+00> : vector<8x128xf32>
    %10 = tpu.matmul %8, %9, %cst_8 {dimension_numbers = #tpu.dot_dimension_numbers<[1], [0], [0], [1], [0, 0, 1, 1], [], []>} : vector<8x128xbf16>, vector<128x128xbf16>, vector<8x128xf32> -> vector<8x128xf32>
    %c0_9 = arith.constant 0 : index
    %c0_10 = arith.constant 0 : index
    %11 = vector.load %arg5[%c0_9, %c0_10] : memref<1x128xf32, #tpu.memory_space<vmem>>, vector<1x128xf32>
    %12 = vector.broadcast %11 : vector<1x128xf32> to vector<8x128xf32>
    %13 = arith.addf %10, %12 : vector<8x128xf32>
    %cst_11 = arith.constant 0.000000e+00 : f32
    %14 = vector.broadcast %cst_11 : f32 to vector<8x128xf32>
    %15 = arith.maximumf %13, %14 : vector<8x128xf32>
    %c0_12 = arith.constant 0 : index
    %c0_13 = arith.constant 0 : index
    %16 = vector.load %arg6[%c0_12, %c0_13] : memref<8x128xf32, #tpu.memory_space<vmem>>, vector<8x128xf32>
    tpu.vector_store %arg6[%c0_12, %c0_13], %15 {strides = array<i32>} : memref<8x128xf32, #tpu.memory_space<vmem>>, vector<8x128xf32>,
    return
  }
  func.func @transform_0(%arg0: i32) -> (i32, i32) {
    %c0_i32 = arith.constant 0 : i32
    %c0_i32_0 = arith.constant 0 : i32
    return %arg0, %c0_i32 : i32, i32
  }
  func.func @transform_1(%arg0: i32) -> (i32, i32) {
    %c0_i32 = arith.constant 0 : i32
    %c0_i32_0 = arith.constant 0 : i32
    %c0_i32_1 = arith.constant 0 : i32
    return %c0_i32, %c0_i32_0 : i32, i32
  }
  func.func @transform_2(%arg0: i32) -> (i32, i32) {
    %c0_i32 = arith.constant 0 : i32
    %c0_i32_0 = arith.constant 0 : i32
    %c0_i32_1 = arith.constant 0 : i32
    return %c0_i32, %c0_i32_0 : i32, i32
  }
  func.func @transform_3(%arg0: i32) -> (i32, i32) {
    %c0_i32 = arith.constant 0 : i32
    %c0_i32_0 = arith.constant 0 : i32
    %c0_i32_1 = arith.constant 0 : i32
    return %c0_i32, %c0_i32_0 : i32, i32
  }
  func.func @transform_4(%arg0: i32) -> (i32, i32) {
    %c0_i32 = arith.constant 0 : i32
    %c0_i32_0 = arith.constant 0 : i32
    %c0_i32_1 = arith.constant 0 : i32
    return %c0_i32, %c0_i32_0 : i32, i32
  }
  func.func @transform_5(%arg0: i32) -> (i32, i32) {
    %c0_i32 = arith.constant 0 : i32
    %c0_i32_0 = arith.constant 0 : i32
    return %arg0, %c0_i32 : i32, i32
  }
}

</mosaic_0001>

<llo_original>
// kernel: tpu_custom_call.1
$region0: #{tpu_custom_call.1}
  #allocation0 [shape = 'u32[]', space=smem, size = 0x4, offset = 0x4, fixed_abs, tag = 'smem constant byte address 0x4 - core index']
  #allocation1 [shape = 'u32[72,128]{1,0:T(1,128)}', space=vmem, size = 0x9000, scoped, tag = 'internal scratch']
  %s0 = inlined_call_operand.hbm [shape: bf16[8,256], index: 0, kind: input, shape index: {}]
  %s1 = inlined_call_operand.hbm [shape: bf16[256,128], index: 1, kind: input, shape index: {}]
  %s2 = inlined_call_operand.vmem [shape: f32[1,128], index: 2, kind: input, shape index: {}]
  %s3 = inlined_call_operand.hbm [shape: bf16[128,128], index: 3, kind: input, shape index: {}]
  %s4 = inlined_call_operand.vmem [shape: f32[1,128], index: 4, kind: input, shape index: {}]
  %s5 = inlined_call_operand.hbm [shape: f32[8,128], index: 5, kind: output, shape index: {}]
  %s6 = sld [smem:[#allocation0]]
  $region42: #{tpu_custom_call.1} parent=0
    _
  %s8 = ssub.s32 1, %s6
  %s9 = scalar_select 0, %s8, %s6
  $region1: #{tpu_custom_call.1} parent=0
    #allocation2 [shape = 'u8[4096]{0}', space=vmem, size = 0x1000, scoped, tag = 'input window, operand 0, single buffered']
    #allocation3 [shape = 's32[1]{0}', space=sflag, size = 0x4, scoped, tag = 'scoped memory for tpu_custom_call.1']
    #allocation4 [shape = 's32[1]{0}', space=sflag, size = 0x4, scoped, tag = 'scoped memory for tpu_custom_call.1']
    #allocation5 [shape = 'u8[65536]{0}', space=vmem, size = 0x10000, scoped, tag = 'input window, operand 1, single buffered']
    #allocation6 [shape = 's32[1]{0}', space=sflag, size = 0x4, scoped, tag = 'scoped memory for tpu_custom_call.1']
    #allocation7 [shape = 'u8[32768]{0}', space=vmem, size = 0x8000, scoped, tag = 'input window, operand 3, single buffered']
    #allocation8 [shape = 'u8[4096]{0}', space=vmem, size = 0x1000, scoped, tag = 'output window, operand 0, single buffered']
    %10 = vsyncpa [#allocation3], 0
    %11 = vsyncpa [#allocation6], 0
    %12 = vsyncpa [#allocation4], 0
    // Predicated region
    $region2: #{tpu_custom_call.1} parent=1 // pred_check
      _
    $region3: #{tpu_custom_call.1} parent=1 // pred_check_branch
      %14 = sbr.rel (0) target = $region5
    $region4: #{tpu_custom_call.1} parent=1 // pred_region
      %16 = vsyncadd [#allocation3], 0
      %s18 = sshll.u32 %s0, 4
      %s19 = int_to_ptr.hbm [resolvable:$true] %s18
      %s20 = sshll.u32 [#allocation2], 4
      %s21 = int_to_ptr.vmem [resolvable:$true] %s20
      %23 = dma.hbm_to_vmem [thread:$0]  %s19, 128, %s21, [#allocation3]
    $region5: #{tpu_custom_call.1} parent=1 // pred_fallthru
      _
    // Predicated region
    $region6: #{tpu_custom_call.1} parent=1 // pred_check
      _
    $region7: #{tpu_custom_call.1} parent=1 // pred_check_branch
      %25 = sbr.rel (0) target = $region9
    $region8: #{tpu_custom_call.1} parent=1 // pred_region
      %27 = vsyncadd [#allocation6], 0
      %s28 = sshll.u32 %s1, 4
      %s29 = int_to_ptr.hbm [resolvable:$true] %s28
      %s30 = sshll.u32 [#allocation5], 4
      %s31 = int_to_ptr.vmem [resolvable:$true] %s30
      %36 = dma.hbm_to_vmem [thread:$0]  %s29, 2048, %s31, [#allocation6], 64, 64, 4
    $region9: #{tpu_custom_call.1} parent=1 // pred_fallthru
      _
    // Predicated region
    $region10: #{tpu_custom_call.1} parent=1 // pred_check
      _
    $region11: #{tpu_custom_call.1} parent=1 // pred_check_branch
      %38 = sbr.rel (0) target = $region13
    $region12: #{tpu_custom_call.1} parent=1 // pred_region
      _
    $region13: #{tpu_custom_call.1} parent=1 // pred_fallthru
      _
    // Predicated region
    $region14: #{tpu_custom_call.1} parent=1 // pred_check
      _
    $region15: #{tpu_custom_call.1} parent=1 // pred_check_branch
      %40 = sbr.rel (0) target = $region17
    $region16: #{tpu_custom_call.1} parent=1 // pred_region
      %42 = vsyncadd [#allocation6], 0
      %s43 = sshll.u32 %s3, 4
      %s44 = int_to_ptr.hbm [resolvable:$true] %s43
      %s45 = sshll.u32 [#allocation7], 4
      %s46 = int_to_ptr.vmem [resolvable:$true] %s45
      %51 = dma.hbm_to_vmem [thread:$0]  %s44, 1024, %s46, [#allocation6], 64, 64, 4
    $region17: #{tpu_custom_call.1} parent=1 // pred_fallthru
      _
    // Predicated region
    $region18: #{tpu_custom_call.1} parent=1 // pred_check
      _
    $region19: #{tpu_custom_call.1} parent=1 // pred_check_branch
      %53 = sbr.rel (0) target = $region21
    $region20: #{tpu_custom_call.1} parent=1 // pred_region
      _
    $region21: #{tpu_custom_call.1} parent=1 // pred_fallthru
      _
    // Predicated region
    $region22: #{tpu_custom_call.1} parent=1 // pred_check
      _
    $region23: #{tpu_custom_call.1} parent=1 // pred_check_branch
      %55 = sbr.rel (0) target = $region25
    $region24: #{tpu_custom_call.1} parent=1 // pred_region
      %57 = dma.done [#allocation3], 128
    $region25: #{tpu_custom_call.1} parent=1 // pred_fallthru
      _
    // Predicated region
    $region26: #{tpu_custom_call.1} parent=1 // pred_check
      _
    $region27: #{tpu_custom_call.1} parent=1 // pred_check_branch
      %59 = sbr.rel (0) target = $region29
    $region28: #{tpu_custom_call.1} parent=1 // pred_region
      %61 = dma.done [#allocation6], 2048
    $region29: #{tpu_custom_call.1} parent=1 // pred_fallthru
      _
    // Predicated region
    $region30: #{tpu_custom_call.1} parent=1 // pred_check
      _
    $region31: #{tpu_custom_call.1} parent=1 // pred_check_branch
      %63 = sbr.rel (0) target = $region33
    $region32: #{tpu_custom_call.1} parent=1 // pred_region
      %65 = dma.done [#allocation6], 1024
    $region33: #{tpu_custom_call.1} parent=1 // pred_fallthru
      _
    %v66 = vld [vmem:[#allocation2] sm:$0xff]
    %v67 = vld [vmem:[#allocation5] sm:$0xf]
    %v68 = vld [vmem:[#allocation5 + $0x4] sm:$0xf]
    %v69 = vld [vmem:[#allocation5 + $0x8] sm:$0xf]
    %v70 = vld [vmem:[#allocation5 + $0xc] sm:$0xf]
    %v71 = vld [vmem:[#allocation5 + $0x10] sm:$0xf]
    %v72 = vld [vmem:[#allocation5 + $0x14] sm:$0xf]
    %v73 = vld [vmem:[#allocation5 + $0x18] sm:$0xf]
    %v74 = vld [vmem:[#allocation5 + $0x1c] sm:$0xf]
    %v75 = vld [vmem:[#allocation5 + $0x20] sm:$0xf]
    %v76 = vld [vmem:[#allocation5 + $0x24] sm:$0xf]
    %v77 = vld [vmem:[#allocation5 + $0x28] sm:$0xf]
    %v78 = vld [vmem:[#allocation5 + $0x2c] sm:$0xf]
    %v79 = vld [vmem:[#allocation5 + $0x30] sm:$0xf]
    %v80 = vld [vmem:[#allocation5 + $0x34] sm:$0xf]
    %v81 = vld [vmem:[#allocation5 + $0x38] sm:$0xf]
    %v82 = vld [vmem:[#allocation5 + $0x3c] sm:$0xf]
    %v83 = vld [vmem:[#allocation5 + $0x40] sm:$0xf]
    %v84 = vld [vmem:[#allocation5 + $0x44] sm:$0xf]
    %v85 = vld [vmem:[#allocation5 + $0x48] sm:$0xf]
    %v86 = vld [vmem:[#allocation5 + $0x4c] sm:$0xf]
    %v87 = vld [vmem:[#allocation5 + $0x50] sm:$0xf]
    %v88 = vld [vmem:[#allocation5 + $0x54] sm:$0xf]
    %v89 = vld [vmem:[#allocation5 + $0x58] sm:$0xf]
    %v90 = vld [vmem:[#allocation5 + $0x5c] sm:$0xf]
    %v91 = vld [vmem:[#allocation5 + $0x60] sm:$0xf]
    %v92 = vld [vmem:[#allocation5 + $0x64] sm:$0xf]
    %v93 = vld [vmem:[#allocation5 + $0x68] sm:$0xf]
    %v94 = vld [vmem:[#allocation5 + $0x6c] sm:$0xf]
    %v95 = vld [vmem:[#allocation5 + $0x70] sm:$0xf]
    %v96 = vld [vmem:[#allocation5 + $0x74] sm:$0xf]
    %v97 = vld [vmem:[#allocation5 + $0x78] sm:$0xf]
    %v98 = vld [vmem:[#allocation5 + $0x7c] sm:$0xf]
    %v99 = vld [vmem:[%s2] sm:$0x1]
    %v101 = vperm.slane %v99, 0
    %v104 = vunpack.c.l.b16 %v66
    %v105 = vunpack.c.h.b16 %v66
    %v106 = vpack.c.b16 %v104, %v104
    %v107 = vpack.c.b16 %v105, %v105
    %v142 = vunpack.c.l.b16 %v67
    %v143 = vunpack.c.l.b16 %v68
    %v144 = vunpack.c.l.b16 %v69
    %v145 = vunpack.c.l.b16 %v70
    %v146 = vunpack.c.l.b16 %v71
    %v147 = vunpack.c.l.b16 %v72
    %v148 = vunpack.c.l.b16 %v73
    %v149 = vunpack.c.l.b16 %v74
    %v150 = vunpack.c.l.b16 %v75
    %v151 = vunpack.c.l.b16 %v76
    %v152 = vunpack.c.l.b16 %v77
    %v153 = vunpack.c.l.b16 %v78
    %v154 = vunpack.c.l.b16 %v79
    %v155 = vunpack.c.l.b16 %v80
    %v156 = vunpack.c.l.b16 %v81
    %v157 = vunpack.c.l.b16 %v82
    %v158 = vunpack.c.l.b16 %v83
    %v159 = vunpack.c.l.b16 %v84
    %v160 = vunpack.c.l.b16 %v85
    %v161 = vunpack.c.l.b16 %v86
    %v162 = vunpack.c.l.b16 %v87
    %v163 = vunpack.c.l.b16 %v88
    %v164 = vunpack.c.l.b16 %v89
    %v165 = vunpack.c.l.b16 %v90
    %v166 = vunpack.c.l.b16 %v91
    %v167 = vunpack.c.l.b16 %v92
    %v168 = vunpack.c.l.b16 %v93
    %v169 = vunpack.c.l.b16 %v94
    %v170 = vunpack.c.l.b16 %v95
    %v171 = vunpack.c.l.b16 %v96
    %v172 = vunpack.c.l.b16 %v97
    %v173 = vunpack.c.l.b16 %v98
    %v174 = vpack.c.b16 %v143, %v142
    %v175 = vpack.c.b16 %v145, %v144
    %v176 = vpack.c.b16 %v147, %v146
    %v177 = vpack.c.b16 %v149, %v148
    %v178 = vpack.c.b16 %v151, %v150
    %v179 = vpack.c.b16 %v153, %v152
    %v180 = vpack.c.b16 %v155, %v154
    %v181 = vpack.c.b16 %v157, %v156
    %v182 = vpack.c.b16 %v159, %v158
    %v183 = vpack.c.b16 %v161, %v160
    %v184 = vpack.c.b16 %v163, %v162
    %v185 = vpack.c.b16 %v165, %v164
    %v186 = vpack.c.b16 %v167, %v166
    %v187 = vpack.c.b16 %v169, %v168
    %v188 = vpack.c.b16 %v171, %v170
    %v189 = vpack.c.b16 %v173, %v172
    %206 = vmatpush.bf16.msra.mxu0 %v181
    %207 = vmatpush.bf16.msra.mxu0 %v180
    %208 = vmatpush.bf16.msra.mxu0 %v179
    %209 = vmatpush.bf16.msra.mxu0 %v178
    %210 = vmatpush.bf16.msra.mxu0 %v177
    %211 = vmatpush.bf16.msra.mxu0 %v176
    %212 = vmatpush.bf16.msra.mxu0 %v175
    %213 = vmatpush.bf16.msra.mxu0 %v174
    %214 = vmatmul.bf16.gmra.mxu0 %v106
    %v215 = vpop.f32.mrf.mxu0
    %v216 = vadd.f32 %v101, %v215
    %v217 = vpop.f32.mrf.mxu0
    %218 = vdwg.mxu0
    %219 = vmatpush.bf16.msra.mxu0 %v189
    %220 = vmatpush.bf16.msra.mxu0 %v188
    %221 = vmatpush.bf16.msra.mxu0 %v187
    %222 = vmatpush.bf16.msra.mxu0 %v186
    %223 = vmatpush.bf16.msra.mxu0 %v185
    %224 = vmatpush.bf16.msra.mxu0 %v184
    %225 = vmatpush.bf16.msra.mxu0 %v183
    %226 = vmatpush.bf16.msra.mxu0 %v182
    %227 = vmatmul.bf16.gmra.mxu0 %v107
    %v228 = vpop.f32.mrf.mxu0
    %v229 = vadd.f32 %v216, %v228
    %v230 = vpop.f32.mrf.mxu0
    %231 = vdwg.mxu0
    %v232 = vmax.f32 %v229, 0.0
    %v233 = vpack.c.bf16 %v232, %v232
    %v234 = vld [vmem:[#allocation7] sm:$0xf]
    %v235 = vld [vmem:[#allocation7 + $0x4] sm:$0xf]
    %v236 = vld [vmem:[#allocation7 + $0x8] sm:$0xf]
    %v237 = vld [vmem:[#allocation7 + $0xc] sm:$0xf]
    %v238 = vld [vmem:[#allocation7 + $0x10] sm:$0xf]
    %v239 = vld [vmem:[#allocation7 + $0x14] sm:$0xf]
    %v240 = vld [vmem:[#allocation7 + $0x18] sm:$0xf]
    %v241 = vld [vmem:[#allocation7 + $0x1c] sm:$0xf]
    %v242 = vld [vmem:[#allocation7 + $0x20] sm:$0xf]
    %v243 = vld [vmem:[#allocation7 + $0x24] sm:$0xf]
    %v244 = vld [vmem:[#allocation7 + $0x28] sm:$0xf]
    %v245 = vld [vmem:[#allocation7 + $0x2c] sm:$0xf]
    %v246 = vld [vmem:[#allocation7 + $0x30] sm:$0xf]
    %v247 = vld [vmem:[#allocation7 + $0x34] sm:$0xf]
    %v248 = vld [vmem:[#allocation7 + $0x38] sm:$0xf]
    %v249 = vld [vmem:[#allocation7 + $0x3c] sm:$0xf]
    %v250 = vld [vmem:[%s4] sm:$0x1]
    %v252 = vperm.slane %v250, 0
    %v270 = vunpack.c.l.b16 %v234
    %v271 = vunpack.c.l.b16 %v235
    %v272 = vunpack.c.l.b16 %v236
    %v273 = vunpack.c.l.b16 %v237
    %v274 = vunpack.c.l.b16 %v238
    %v275 = vunpack.c.l.b16 %v239
    %v276 = vunpack.c.l.b16 %v240
    %v277 = vunpack.c.l.b16 %v241
    %v278 = vunpack.c.l.b16 %v242
    %v279 = vunpack.c.l.b16 %v243
    %v280 = vunpack.c.l.b16 %v244
    %v281 = vunpack.c.l.b16 %v245
    %v282 = vunpack.c.l.b16 %v246
    %v283 = vunpack.c.l.b16 %v247
    %v284 = vunpack.c.l.b16 %v248
    %v285 = vunpack.c.l.b16 %v249
    %v286 = vpack.c.b16 %v271, %v270
    %v287 = vpack.c.b16 %v273, %v272
    %v288 = vpack.c.b16 %v275, %v274
    %v289 = vpack.c.b16 %v277, %v276
    %v290 = vpack.c.b16 %v279, %v278
    %v291 = vpack.c.b16 %v281, %v280
    %v292 = vpack.c.b16 %v283, %v282
    %v293 = vpack.c.b16 %v285, %v284
    %302 = vmatpush.bf16.msra.mxu0 %v293
    %303 = vmatpush.bf16.msra.mxu0 %v292
    %304 = vmatpush.bf16.msra.mxu0 %v291
    %305 = vmatpush.bf16.msra.mxu0 %v290
    %306 = vmatpush.bf16.msra.mxu0 %v289
    %307 = vmatpush.bf16.msra.mxu0 %v288
    %308 = vmatpush.bf16.msra.mxu0 %v287
    %309 = vmatpush.bf16.msra.mxu0 %v286
    %310 = vmatmul.bf16.gmra.mxu0 %v233
    %v311 = vpop.f32.mrf.mxu0
    %v312 = vadd.f32 %v252, %v311
    %v313 = vpop.f32.mrf.mxu0
    %314 = vdwg.mxu0
    %v315 = vmax.f32 %v312, 0.0
    %316 = vst [vmem:[#allocation8] sm:$0xff] %v315
    // Predicated region
    $region34: #{tpu_custom_call.1} parent=1 // pred_check
      _
    $region35: #{tpu_custom_call.1} parent=1 // pred_check_branch
      %318 = sbr.rel (0) target = $region37
    $region36: #{tpu_custom_call.1} parent=1 // pred_region
      %320 = vsyncadd [#allocation4], 0
      %s322 = sshll.u32 [#allocation8], 4
      %s323 = int_to_ptr.vmem [resolvable:$true] %s322
      %s324 = sshll.u32 %s5, 4
      %s325 = int_to_ptr.hbm [resolvable:$true] %s324
      %327 = dma.vmem_to_hbm [thread:$0]  %s323, 128, %s325, [#allocation4]
    $region37: #{tpu_custom_call.1} parent=1 // pred_fallthru
      _
    // Predicated region
    $region38: #{tpu_custom_call.1} parent=1 // pred_check
      _
    $region39: #{tpu_custom_call.1} parent=1 // pred_check_branch
      %329 = sbr.rel (0) target = $region41
    $region40: #{tpu_custom_call.1} parent=1 // pred_region
      %331 = dma.done [#allocation4], 128
    $region41: #{tpu_custom_call.1} parent=1 // pred_fallthru
      _
    %332 = vsyncpa [#allocation3], 1
    %333 = vsyncpa [#allocation6], 1
    %334 = vsyncpa [#allocation4], 1

</llo_original>
